<compile_context>
chip_gen: v7x
topology: tpu7x:2x2x1
jax: 0.10.0
libtpu: 0.0.40
codegen_flags: <defaults>
</compile_context>

<pallas_src>
import math

import jax
import jax.numpy as jnp
from jax.experimental import pallas as pl
from jax.experimental.pallas import tpu as pltpu


def _round_up(x, m):
    return ((x + m - 1) // m) * m


def _nearest_src_index(out_size, in_size, inv_scale):
    """PyTorch 'nearest': src = floor(dst * inv_scale), clamped to in_size-1."""
    dst = jnp.arange(out_size, dtype=jnp.float32)
    src = jnp.floor(dst * jnp.float32(inv_scale)).astype(jnp.int32)
    return jnp.clip(src, 0, in_size - 1)


def _build_kron_replication(hin, win, hout, wout, inv_h, inv_w, dtype):
    """K[(hi*Win+wi), (ho*Wout+wo)] = 1 iff (hi, wi) is the nearest source of (ho, wo).

    x_flat @ K fuses the H and W nearest expansions into a single 2-D matmul
    with a lane-dense (multiple-of-128 for the test shapes) output minor dim.
    """
    src_h = _nearest_src_index(hout, hin, inv_h)                      # (Hout,)
    src_w = _nearest_src_index(wout, win, inv_w)                      # (Wout,)
    src_flat = (src_h[:, None] * win + src_w[None, :]).reshape(-1)    # (Hout*Wout,)
    rows = jnp.arange(hin * win, dtype=jnp.int32)
    return (rows[:, None] == src_flat[None, :]).astype(dtype)         # (HWin, HWout)


def _upsample_kernel(x_ref, k_ref, o_ref):
    # x_ref: (TC, Hin*Win)   k_ref: (Hin*Win, Hout*Wout)   o_ref: (TC, Hout*Wout)
    # Native-dtype MXU inputs (no f32 staging); f32 accumulation only.
    o_ref[...] = jnp.dot(
        x_ref[...], k_ref[...], preferred_element_type=jnp.float32
    ).astype(o_ref.dtype)


def upsample_nearest(x, size=None, scale_factor=None):
    """Pallas equivalent of F.interpolate(x, size=..., scale_factor=..., mode='nearest'), NCHW."""
    # TODO(synk): the reference forward reads `self.sieze` (typo), so the size=
    # branch raises AttributeError in PyTorch; we implement the intended
    # nearest-interpolation semantics for both size and scale_factor.
    n, c, hin, win = x.shape

    if scale_factor is not None:
        if isinstance(scale_factor, (tuple, list)):
            sh, sw = float(scale_factor[0]), float(scale_factor[1])
        else:
            sh = sw = float(scale_factor)
        hout = int(math.floor(hin * sh))
        wout = int(math.floor(win * sw))
        inv_h, inv_w = 1.0 / sh, 1.0 / sw       # PyTorch uses the explicit scale here
    else:
        if isinstance(size, (tuple, list)):
            hout, wout = int(size[0]), int(size[1])
        else:
            hout = wout = int(size)
        inv_h, inv_w = hin / hout, win / wout

    orig_dtype = x.dtype
    # Integer inputs: no integer MXU path on v7x — compute in f32 (nearest
    # selection through a 0/1 matrix is exact) and cast back at the end.
    if not jnp.issubdtype(orig_dtype, jnp.floating):
        x = x.astype(jnp.float32)
    compute_dtype = x.dtype
    itemsize = jnp.dtype(compute_dtype).itemsize

    nc = n * c
    hw_in = hin * win
    hw_out = hout * wout

    # Replication matrix in the compute dtype (0/1 exact in bf16).  Its
    # BlockSpec index_map is constant, so the pipeline copies it to VMEM once.
    # TODO(synk): for large spatial sizes (K no longer VMEM-sized) this fused
    # matmul should be swapped for a gather / two-pass data-movement form.
    kron = _build_kron_replication(hin, win, hout, wout, inv_h, inv_w, compute_dtype)

    # ---- Channel tiling sized for the smallest VMEM budget (v7x: 64 MiB
    # physical / 32 MiB scoped default), double buffering included.
    sub = max(8, 32 // itemsize)                              # sublane multiple per dtype
    vmem_budget = 24 * 1024 * 1024
    k_bytes = 2 * hw_in * hw_out * itemsize                   # (double-buffered) resident K
    per_row = 2 * (hw_in + hw_out) * itemsize + hw_out * 4    # streams + f32 accumulator
    avail = max(vmem_budget - k_bytes, per_row * sub)
    tc = max(sub, (avail // per_row) // sub * sub)
    tc = min(tc, _round_up(nc, sub))
    if nc > sub:
        # Keep >= 2 grid steps so both v7x TensorCores get work.
        tc = max(sub, min(tc, _round_up((nc + 1) // 2, sub)))

    nc_pad = _round_up(nc, tc)
    x_flat = x.reshape(nc, hw_in)
    if nc_pad != nc:
        x_flat = jnp.pad(x_flat, ((0, nc_pad - nc), (0, 0)))

    grid = (nc_pad // tc,)

    out_flat = pl.pallas_call(
        _upsample_kernel,
        out_shape=jax.ShapeDtypeStruct((nc_pad, hw_out), compute_dtype),
        grid_spec=pltpu.PrefetchScalarGridSpec(
            num_scalar_prefetch=0,
            grid=grid,
            in_specs=[
                pl.BlockSpec((tc, hw_in), lambda i: (i, 0)),
                pl.BlockSpec((hw_in, hw_out), lambda i: (0, 0)),   # resident: DMA'd once
            ],
            out_specs=pl.BlockSpec((tc, hw_out), lambda i: (i, 0)),
        ),
        compiler_params=pltpu.CompilerParams(
            dimension_semantics=("parallel",),
            vmem_limit_bytes=48 * 1024 * 1024,
        ),
    )(x_flat, kron)

    out = out_flat[:nc].reshape(n, c, hout, wout)
    if out.dtype != orig_dtype:
        out = out.astype(orig_dtype)
    return out


if __name__ == "__main__":
    key = jax.random.PRNGKey(0)
    N, C, H, W = 2, 4, 16, 16
    scale = 2

    x = jax.random.normal(key, (N, C, H, W), dtype=jnp.float32)

    out = upsample_nearest(x, scale_factor=scale)
    out = jax.block_until_ready(out)

    # Pure-JAX nearest reference (integer scale -> simple repeat).
    ref = jnp.repeat(jnp.repeat(x, scale, axis=2), scale, axis=3)
    assert out.shape == (N, C, H * scale, W * scale), out.shape
    assert jnp.allclose(out, ref, atol=1e-6), float(jnp.max(jnp.abs(out - ref)))

    # bf16 path: fed to the MXU natively (no f32 staging); 0/1 selection is exact.
    xb = x.astype(jnp.bfloat16)
    outb = jax.block_until_ready(upsample_nearest(xb, scale_factor=scale))
    refb = jnp.repeat(jnp.repeat(xb, scale, axis=2), scale, axis=3)
    assert outb.dtype == jnp.bfloat16
    assert jnp.array_equal(outb, refb)

    print("KERNEL_OK")
</pallas_src>

<mosaic_0001>
module attributes {stable_mosaic.version = 11 : i64} {
  func.func @_upsample_kernel(%arg0: i32, %arg1: memref<8x256xf32, #tpu.memory_space<vmem>>, %arg2: memref<256x1024xf32, #tpu.memory_space<vmem>>, %arg3: memref<8x1024xf32, #tpu.memory_space<vmem>>) attributes {dimension_semantics = [#tpu.dimension_semantics<parallel>], iteration_bounds = array<i64: 1>, scalar_prefetch = 0 : i64, scratch_operands = 0 : i64, tpu.core_type = #tpu.core_type<tc>, window_params = [{transform_indices = @transform_0, window_bounds = array<i64: 8, 256>}, {pipeline_mode = #tpu.pipeline_mode<synchronous>, transform_indices = @transform_1, window_bounds = array<i64: 256, 1024>}, {transform_indices = @transform_2, window_bounds = array<i64: 8, 1024>}]} {
    %c0 = arith.constant 0 : index
    %c0_0 = arith.constant 0 : index
    %0 = vector.load %arg1[%c0, %c0_0] : memref<8x256xf32, #tpu.memory_space<vmem>>, vector<8x256xf32>
    %c0_1 = arith.constant 0 : index
    %c0_2 = arith.constant 0 : index
    %1 = vector.load %arg2[%c0_1, %c0_2] : memref<256x1024xf32, #tpu.memory_space<vmem>>, vector<256x1024xf32>
    %cst = arith.constant dense<0.000000e+00> : vector<8x1024xf32>
    %2 = tpu.matmul %0, %1, %cst {dimension_numbers = #tpu.dot_dimension_numbers<[1], [0], [0], [1], [0, 0, 1, 1], [], []>} : vector<8x256xf32>, vector<256x1024xf32>, vector<8x1024xf32> -> vector<8x1024xf32>
    %c0_3 = arith.constant 0 : index
    %c0_4 = arith.constant 0 : index
    %3 = vector.load %arg3[%c0_3, %c0_4] : memref<8x1024xf32, #tpu.memory_space<vmem>>, vector<8x1024xf32>
    tpu.vector_store %arg3[%c0_3, %c0_4], %2 {strides = array<i32>} : memref<8x1024xf32, #tpu.memory_space<vmem>>, vector<8x1024xf32>,
    return
  }
  func.func @transform_0(%arg0: i32) -> (i32, i32) {
    %c0_i32 = arith.constant 0 : i32
    %c0_i32_0 = arith.constant 0 : i32
    return %arg0, %c0_i32 : i32, i32
  }
  func.func @transform_1(%arg0: i32) -> (i32, i32) {
    %c0_i32 = arith.constant 0 : i32
    %c0_i32_0 = arith.constant 0 : i32
    %c0_i32_1 = arith.constant 0 : i32
    return %c0_i32, %c0_i32_0 : i32, i32
  }
  func.func @transform_2(%arg0: i32) -> (i32, i32) {
    %c0_i32 = arith.constant 0 : i32
    %c0_i32_0 = arith.constant 0 : i32
    return %arg0, %c0_i32 : i32, i32
  }
}

</mosaic_0001>

<llo_original>
// kernel: tpu_custom_call.1
$region0: #{tpu_custom_call.1}
  #allocation0 [shape = 'u32[]', space=smem, size = 0x4, offset = 0x4, fixed_abs, tag = 'smem constant byte address 0x4 - core index']
  #allocation1 [shape = 'u32[144,128]{1,0:T(1,128)}', space=vmem, size = 0x12000, scoped, tag = 'internal scratch']
  %s0 = inlined_call_operand.hbm [shape: f32[8,256], index: 0, kind: input, shape index: {}]
  %s1 = inlined_call_operand.hbm [shape: f32[256,1024], index: 1, kind: input, shape index: {}]
  %s2 = inlined_call_operand.hbm [shape: f32[8,1024], index: 2, kind: output, shape index: {}]
  %s3 = sld [smem:[#allocation0]]
  $region26: #{tpu_custom_call.1} parent=0
    _
  %s5 = ssub.s32 1, %s3
  %s6 = scalar_select 0, %s5, %s3
  $region1: #{tpu_custom_call.1} parent=0
    #allocation2 [shape = 'u8[8192]{0}', space=vmem, size = 0x2000, scoped, tag = 'input window, operand 0, single buffered']
    #allocation3 [shape = 's32[1]{0}', space=sflag, size = 0x4, scoped, tag = 'scoped memory for tpu_custom_call.1']
    #allocation4 [shape = 's32[1]{0}', space=sflag, size = 0x4, scoped, tag = 'scoped memory for tpu_custom_call.1']
    #allocation5 [shape = 'u8[1048576]{0}', space=vmem, size = 0x100000, scoped, tag = 'input window, operand 1, single buffered']
    #allocation6 [shape = 's32[1]{0}', space=sflag, size = 0x4, scoped, tag = 'scoped memory for tpu_custom_call.1']
    #allocation7 [shape = 'u8[32768]{0}', space=vmem, size = 0x8000, scoped, tag = 'output window, operand 0, single buffered']
    %7 = vsyncpa [#allocation3], 0
    %8 = vsyncpa [#allocation6], 0
    %9 = vsyncpa [#allocation4], 0
    // Predicated region
    $region2: #{tpu_custom_call.1} parent=1 // pred_check
      _
    $region3: #{tpu_custom_call.1} parent=1 // pred_check_branch
      %11 = sbr.rel (0) target = $region5
    $region4: #{tpu_custom_call.1} parent=1 // pred_region
      %s13 = ssub.s32 256, 256
      %14 = vsyncadd [#allocation3], %s13
      %s16 = sshll.u32 [#allocation2], 4
      %s17 = int_to_ptr.vmem [resolvable:$true] %s16
      %19 = dma.hbm_to_vmem [thread:$0]  %s0, 256, %s17, [#allocation3]
    $region5: #{tpu_custom_call.1} parent=1 // pred_fallthru
      _
    // Predicated region
    $region6: #{tpu_custom_call.1} parent=1 // pred_check
      _
    $region7: #{tpu_custom_call.1} parent=1 // pred_check_branch
      %21 = sbr.rel (0) target = $region9
    $region8: #{tpu_custom_call.1} parent=1 // pred_region
      %s23 = ssub.s32 32768, 32768
      %24 = vsyncadd [#allocation6], %s23
      %s25 = sshll.u32 [#allocation5], 4
      %s26 = int_to_ptr.vmem [resolvable:$true] %s25
      %31 = dma.hbm_to_vmem [thread:$0]  %s1, 32768, %s26, [#allocation6], 1024, 1024, 64
    $region9: #{tpu_custom_call.1} parent=1 // pred_fallthru
      _
    // Predicated region
    $region10: #{tpu_custom_call.1} parent=1 // pred_check
      _
    $region11: #{tpu_custom_call.1} parent=1 // pred_check_branch
      %33 = sbr.rel (0) target = $region13
    $region12: #{tpu_custom_call.1} parent=1 // pred_region
      %34 = dma.done [#allocation3], 256
    $region13: #{tpu_custom_call.1} parent=1 // pred_fallthru
      _
    // Predicated region
    $region14: #{tpu_custom_call.1} parent=1 // pred_check
      _
    $region15: #{tpu_custom_call.1} parent=1 // pred_check_branch
      %36 = sbr.rel (0) target = $region17
    $region16: #{tpu_custom_call.1} parent=1 // pred_region
      %37 = dma.done [#allocation6], 32768
    $region17: #{tpu_custom_call.1} parent=1 // pred_fallthru
      _
    %v38 = vld [vmem:[#allocation2] sm:$0xff]
    %v39 = vld [vmem:[#allocation2 + $0x8] sm:$0xff]
    %v40 = vld [vmem:[#allocation5] sm:$0xff]
    %v41 = vld [vmem:[#allocation5 + $0x8] sm:$0xff]
    %v42 = vld [vmem:[#allocation5 + $0x10] sm:$0xff]
    %v43 = vld [vmem:[#allocation5 + $0x18] sm:$0xff]
    %v44 = vld [vmem:[#allocation5 + $0x20] sm:$0xff]
    %v45 = vld [vmem:[#allocation5 + $0x28] sm:$0xff]
    %v46 = vld [vmem:[#allocation5 + $0x30] sm:$0xff]
    %v47 = vld [vmem:[#allocation5 + $0x38] sm:$0xff]
    %v48 = vld [vmem:[#allocation5 + $0x40] sm:$0xff]
    %v49 = vld [vmem:[#allocation5 + $0x48] sm:$0xff]
    %v50 = vld [vmem:[#allocation5 + $0x50] sm:$0xff]
    %v51 = vld [vmem:[#allocation5 + $0x58] sm:$0xff]
    %v52 = vld [vmem:[#allocation5 + $0x60] sm:$0xff]
    %v53 = vld [vmem:[#allocation5 + $0x68] sm:$0xff]
    %v54 = vld [vmem:[#allocation5 + $0x70] sm:$0xff]
    %v55 = vld [vmem:[#allocation5 + $0x78] sm:$0xff]
    %v56 = vld [vmem:[#allocation5 + $0x80] sm:$0xff]
    %v57 = vld [vmem:[#allocation5 + $0x88] sm:$0xff]
    %v58 = vld [vmem:[#allocation5 + $0x90] sm:$0xff]
    %v59 = vld [vmem:[#allocation5 + $0x98] sm:$0xff]
    %v60 = vld [vmem:[#allocation5 + $0xa0] sm:$0xff]
    %v61 = vld [vmem:[#allocation5 + $0xa8] sm:$0xff]
    %v62 = vld [vmem:[#allocation5 + $0xb0] sm:$0xff]
    %v63 = vld [vmem:[#allocation5 + $0xb8] sm:$0xff]
    %v64 = vld [vmem:[#allocation5 + $0xc0] sm:$0xff]
    %v65 = vld [vmem:[#allocation5 + $0xc8] sm:$0xff]
    %v66 = vld [vmem:[#allocation5 + $0xd0] sm:$0xff]
    %v67 = vld [vmem:[#allocation5 + $0xd8] sm:$0xff]
    %v68 = vld [vmem:[#allocation5 + $0xe0] sm:$0xff]
    %v69 = vld [vmem:[#allocation5 + $0xe8] sm:$0xff]
    %v70 = vld [vmem:[#allocation5 + $0xf0] sm:$0xff]
    %v71 = vld [vmem:[#allocation5 + $0xf8] sm:$0xff]
    %v72 = vld [vmem:[#allocation5 + $0x100] sm:$0xff]
    %v73 = vld [vmem:[#allocation5 + $0x108] sm:$0xff]
    %v74 = vld [vmem:[#allocation5 + $0x110] sm:$0xff]
    %v75 = vld [vmem:[#allocation5 + $0x118] sm:$0xff]
    %v76 = vld [vmem:[#allocation5 + $0x120] sm:$0xff]
    %v77 = vld [vmem:[#allocation5 + $0x128] sm:$0xff]
    %v78 = vld [vmem:[#allocation5 + $0x130] sm:$0xff]
    %v79 = vld [vmem:[#allocation5 + $0x138] sm:$0xff]
    %v80 = vld [vmem:[#allocation5 + $0x140] sm:$0xff]
    %v81 = vld [vmem:[#allocation5 + $0x148] sm:$0xff]
    %v82 = vld [vmem:[#allocation5 + $0x150] sm:$0xff]
    %v83 = vld [vmem:[#allocation5 + $0x158] sm:$0xff]
    %v84 = vld [vmem:[#allocation5 + $0x160] sm:$0xff]
    %v85 = vld [vmem:[#allocation5 + $0x168] sm:$0xff]
    %v86 = vld [vmem:[#allocation5 + $0x170] sm:$0xff]
    %v87 = vld [vmem:[#allocation5 + $0x178] sm:$0xff]
    %v88 = vld [vmem:[#allocation5 + $0x180] sm:$0xff]
    %v89 = vld [vmem:[#allocation5 + $0x188] sm:$0xff]
    %v90 = vld [vmem:[#allocation5 + $0x190] sm:$0xff]
    %v91 = vld [vmem:[#allocation5 + $0x198] sm:$0xff]
    %v92 = vld [vmem:[#allocation5 + $0x1a0] sm:$0xff]
    %v93 = vld [vmem:[#allocation5 + $0x1a8] sm:$0xff]
    %v94 = vld [vmem:[#allocation5 + $0x1b0] sm:$0xff]
    %v95 = vld [vmem:[#allocation5 + $0x1b8] sm:$0xff]
    %v96 = vld [vmem:[#allocation5 + $0x1c0] sm:$0xff]
    %v97 = vld [vmem:[#allocation5 + $0x1c8] sm:$0xff]
    %v98 = vld [vmem:[#allocation5 + $0x1d0] sm:$0xff]
    %v99 = vld [vmem:[#allocation5 + $0x1d8] sm:$0xff]
    %v100 = vld [vmem:[#allocation5 + $0x1e0] sm:$0xff]
    %v101 = vld [vmem:[#allocation5 + $0x1e8] sm:$0xff]
    %v102 = vld [vmem:[#allocation5 + $0x1f0] sm:$0xff]
    %v103 = vld [vmem:[#allocation5 + $0x1f8] sm:$0xff]
    %v104 = vld [vmem:[#allocation5 + $0x200] sm:$0xff]
    %v105 = vld [vmem:[#allocation5 + $0x208] sm:$0xff]
    %v106 = vld [vmem:[#allocation5 + $0x210] sm:$0xff]
    %v107 = vld [vmem:[#allocation5 + $0x218] sm:$0xff]
    %v108 = vld [vmem:[#allocation5 + $0x220] sm:$0xff]
    %v109 = vld [vmem:[#allocation5 + $0x228] sm:$0xff]
    %v110 = vld [vmem:[#allocation5 + $0x230] sm:$0xff]
    %v111 = vld [vmem:[#allocation5 + $0x238] sm:$0xff]
    %v112 = vld [vmem:[#allocation5 + $0x240] sm:$0xff]
    %v113 = vld [vmem:[#allocation5 + $0x248] sm:$0xff]
    %v114 = vld [vmem:[#allocation5 + $0x250] sm:$0xff]
    %v115 = vld [vmem:[#allocation5 + $0x258] sm:$0xff]
    %v116 = vld [vmem:[#allocation5 + $0x260] sm:$0xff]
    %v117 = vld [vmem:[#allocation5 + $0x268] sm:$0xff]
    %v118 = vld [vmem:[#allocation5 + $0x270] sm:$0xff]
    %v119 = vld [vmem:[#allocation5 + $0x278] sm:$0xff]
    %v120 = vld [vmem:[#allocation5 + $0x280] sm:$0xff]
    %v121 = vld [vmem:[#allocation5 + $0x288] sm:$0xff]
    %v122 = vld [vmem:[#allocation5 + $0x290] sm:$0xff]
    %v123 = vld [vmem:[#allocation5 + $0x298] sm:$0xff]
    %v124 = vld [vmem:[#allocation5 + $0x2a0] sm:$0xff]
    %v125 = vld [vmem:[#allocation5 + $0x2a8] sm:$0xff]
    %v126 = vld [vmem:[#allocation5 + $0x2b0] sm:$0xff]
    %v127 = vld [vmem:[#allocation5 + $0x2b8] sm:$0xff]
    %v128 = vld [vmem:[#allocation5 + $0x2c0] sm:$0xff]
    %v129 = vld [vmem:[#allocation5 + $0x2c8] sm:$0xff]
    %v130 = vld [vmem:[#allocation5 + $0x2d0] sm:$0xff]
    %v131 = vld [vmem:[#allocation5 + $0x2d8] sm:$0xff]
    %v132 = vld [vmem:[#allocation5 + $0x2e0] sm:$0xff]
    %v133 = vld [vmem:[#allocation5 + $0x2e8] sm:$0xff]
    %v134 = vld [vmem:[#allocation5 + $0x2f0] sm:$0xff]
    %v135 = vld [vmem:[#allocation5 + $0x2f8] sm:$0xff]
    %v136 = vld [vmem:[#allocation5 + $0x300] sm:$0xff]
    %v137 = vld [vmem:[#allocation5 + $0x308] sm:$0xff]
    %v138 = vld [vmem:[#allocation5 + $0x310] sm:$0xff]
    %v139 = vld [vmem:[#allocation5 + $0x318] sm:$0xff]
    %v140 = vld [vmem:[#allocation5 + $0x320] sm:$0xff]
    %v141 = vld [vmem:[#allocation5 + $0x328] sm:$0xff]
    %v142 = vld [vmem:[#allocation5 + $0x330] sm:$0xff]
    %v143 = vld [vmem:[#allocation5 + $0x338] sm:$0xff]
    %v144 = vld [vmem:[#allocation5 + $0x340] sm:$0xff]
    %v145 = vld [vmem:[#allocation5 + $0x348] sm:$0xff]
    %v146 = vld [vmem:[#allocation5 + $0x350] sm:$0xff]
    %v147 = vld [vmem:[#allocation5 + $0x358] sm:$0xff]
    %v148 = vld [vmem:[#allocation5 + $0x360] sm:$0xff]
    %v149 = vld [vmem:[#allocation5 + $0x368] sm:$0xff]
    %v150 = vld [vmem:[#allocation5 + $0x370] sm:$0xff]
    %v151 = vld [vmem:[#allocation5 + $0x378] sm:$0xff]
    %v152 = vld [vmem:[#allocation5 + $0x380] sm:$0xff]
    %v153 = vld [vmem:[#allocation5 + $0x388] sm:$0xff]
    %v154 = vld [vmem:[#allocation5 + $0x390] sm:$0xff]
    %v155 = vld [vmem:[#allocation5 + $0x398] sm:$0xff]
    %v156 = vld [vmem:[#allocation5 + $0x3a0] sm:$0xff]
    %v157 = vld [vmem:[#allocation5 + $0x3a8] sm:$0xff]
    %v158 = vld [vmem:[#allocation5 + $0x3b0] sm:$0xff]
    %v159 = vld [vmem:[#allocation5 + $0x3b8] sm:$0xff]
    %v160 = vld [vmem:[#allocation5 + $0x3c0] sm:$0xff]
    %v161 = vld [vmem:[#allocation5 + $0x3c8] sm:$0xff]
    %v162 = vld [vmem:[#allocation5 + $0x3d0] sm:$0xff]
    %v163 = vld [vmem:[#allocation5 + $0x3d8] sm:$0xff]
    %v164 = vld [vmem:[#allocation5 + $0x3e0] sm:$0xff]
    %v165 = vld [vmem:[#allocation5 + $0x3e8] sm:$0xff]
    %v166 = vld [vmem:[#allocation5 + $0x3f0] sm:$0xff]
    %v167 = vld [vmem:[#allocation5 + $0x3f8] sm:$0xff]
    %v168 = vld [vmem:[#allocation5 + $0x400] sm:$0xff]
    %v169 = vld [vmem:[#allocation5 + $0x408] sm:$0xff]
    %v170 = vld [vmem:[#allocation5 + $0x410] sm:$0xff]
    %v171 = vld [vmem:[#allocation5 + $0x418] sm:$0xff]
    %v172 = vld [vmem:[#allocation5 + $0x420] sm:$0xff]
    %v173 = vld [vmem:[#allocation5 + $0x428] sm:$0xff]
    %v174 = vld [vmem:[#allocation5 + $0x430] sm:$0xff]
    %v175 = vld [vmem:[#allocation5 + $0x438] sm:$0xff]
    %v176 = vld [vmem:[#allocation5 + $0x440] sm:$0xff]
    %v177 = vld [vmem:[#allocation5 + $0x448] sm:$0xff]
    %v178 = vld [vmem:[#allocation5 + $0x450] sm:$0xff]
    %v179 = vld [vmem:[#allocation5 + $0x458] sm:$0xff]
    %v180 = vld [vmem:[#allocation5 + $0x460] sm:$0xff]
    %v181 = vld [vmem:[#allocation5 + $0x468] sm:$0xff]
    %v182 = vld [vmem:[#allocation5 + $0x470] sm:$0xff]
    %v183 = vld [vmem:[#allocation5 + $0x478] sm:$0xff]
    %v184 = vld [vmem:[#allocation5 + $0x480] sm:$0xff]
    %v185 = vld [vmem:[#allocation5 + $0x488] sm:$0xff]
    %v186 = vld [vmem:[#allocation5 + $0x490] sm:$0xff]
    %v187 = vld [vmem:[#allocation5 + $0x498] sm:$0xff]
    %v188 = vld [vmem:[#allocation5 + $0x4a0] sm:$0xff]
    %v189 = vld [vmem:[#allocation5 + $0x4a8] sm:$0xff]
    %v190 = vld [vmem:[#allocation5 + $0x4b0] sm:$0xff]
    %v191 = vld [vmem:[#allocation5 + $0x4b8] sm:$0xff]
    %v192 = vld [vmem:[#allocation5 + $0x4c0] sm:$0xff]
    %v193 = vld [vmem:[#allocation5 + $0x4c8] sm:$0xff]
    %v194 = vld [vmem:[#allocation5 + $0x4d0] sm:$0xff]
    %v195 = vld [vmem:[#allocation5 + $0x4d8] sm:$0xff]
    %v196 = vld [vmem:[#allocation5 + $0x4e0] sm:$0xff]
    %v197 = vld [vmem:[#allocation5 + $0x4e8] sm:$0xff]
    %v198 = vld [vmem:[#allocation5 + $0x4f0] sm:$0xff]
    %v199 = vld [vmem:[#allocation5 + $0x4f8] sm:$0xff]
    %v200 = vld [vmem:[#allocation5 + $0x500] sm:$0xff]
    %v201 = vld [vmem:[#allocation5 + $0x508] sm:$0xff]
    %v202 = vld [vmem:[#allocation5 + $0x510] sm:$0xff]
    %v203 = vld [vmem:[#allocation5 + $0x518] sm:$0xff]
    %v204 = vld [vmem:[#allocation5 + $0x520] sm:$0xff]
    %v205 = vld [vmem:[#allocation5 + $0x528] sm:$0xff]
    %v206 = vld [vmem:[#allocation5 + $0x530] sm:$0xff]
    %v207 = vld [vmem:[#allocation5 + $0x538] sm:$0xff]
    %v208 = vld [vmem:[#allocation5 + $0x540] sm:$0xff]
    %v209 = vld [vmem:[#allocation5 + $0x548] sm:$0xff]
    %v210 = vld [vmem:[#allocation5 + $0x550] sm:$0xff]
    %v211 = vld [vmem:[#allocation5 + $0x558] sm:$0xff]
    %v212 = vld [vmem:[#allocation5 + $0x560] sm:$0xff]
    %v213 = vld [vmem:[#allocation5 + $0x568] sm:$0xff]
    %v214 = vld [vmem:[#allocation5 + $0x570] sm:$0xff]
    %v215 = vld [vmem:[#allocation5 + $0x578] sm:$0xff]
    %v216 = vld [vmem:[#allocation5 + $0x580] sm:$0xff]
    %v217 = vld [vmem:[#allocation5 + $0x588] sm:$0xff]
    %v218 = vld [vmem:[#allocation5 + $0x590] sm:$0xff]
    %v219 = vld [vmem:[#allocation5 + $0x598] sm:$0xff]
    %v220 = vld [vmem:[#allocation5 + $0x5a0] sm:$0xff]
    %v221 = vld [vmem:[#allocation5 + $0x5a8] sm:$0xff]
    %v222 = vld [vmem:[#allocation5 + $0x5b0] sm:$0xff]
    %v223 = vld [vmem:[#allocation5 + $0x5b8] sm:$0xff]
    %v224 = vld [vmem:[#allocation5 + $0x5c0] sm:$0xff]
    %v225 = vld [vmem:[#allocation5 + $0x5c8] sm:$0xff]
    %v226 = vld [vmem:[#allocation5 + $0x5d0] sm:$0xff]
    %v227 = vld [vmem:[#allocation5 + $0x5d8] sm:$0xff]
    %v228 = vld [vmem:[#allocation5 + $0x5e0] sm:$0xff]
    %v229 = vld [vmem:[#allocation5 + $0x5e8] sm:$0xff]
    %v230 = vld [vmem:[#allocation5 + $0x5f0] sm:$0xff]
    %v231 = vld [vmem:[#allocation5 + $0x5f8] sm:$0xff]
    %v232 = vld [vmem:[#allocation5 + $0x600] sm:$0xff]
    %v233 = vld [vmem:[#allocation5 + $0x608] sm:$0xff]
    %v234 = vld [vmem:[#allocation5 + $0x610] sm:$0xff]
    %v235 = vld [vmem:[#allocation5 + $0x618] sm:$0xff]
    %v236 = vld [vmem:[#allocation5 + $0x620] sm:$0xff]
    %v237 = vld [vmem:[#allocation5 + $0x628] sm:$0xff]
    %v238 = vld [vmem:[#allocation5 + $0x630] sm:$0xff]
    %v239 = vld [vmem:[#allocation5 + $0x638] sm:$0xff]
    %v240 = vld [vmem:[#allocation5 + $0x640] sm:$0xff]
    %v241 = vld [vmem:[#allocation5 + $0x648] sm:$0xff]
    %v242 = vld [vmem:[#allocation5 + $0x650] sm:$0xff]
    %v243 = vld [vmem:[#allocation5 + $0x658] sm:$0xff]
    %v244 = vld [vmem:[#allocation5 + $0x660] sm:$0xff]
    %v245 = vld [vmem:[#allocation5 + $0x668] sm:$0xff]
    %v246 = vld [vmem:[#allocation5 + $0x670] sm:$0xff]
    %v247 = vld [vmem:[#allocation5 + $0x678] sm:$0xff]
    %v248 = vld [vmem:[#allocation5 + $0x680] sm:$0xff]
    %v249 = vld [vmem:[#allocation5 + $0x688] sm:$0xff]
    %v250 = vld [vmem:[#allocation5 + $0x690] sm:$0xff]
    %v251 = vld [vmem:[#allocation5 + $0x698] sm:$0xff]
    %v252 = vld [vmem:[#allocation5 + $0x6a0] sm:$0xff]
    %v253 = vld [vmem:[#allocation5 + $0x6a8] sm:$0xff]
    %v254 = vld [vmem:[#allocation5 + $0x6b0] sm:$0xff]
    %v255 = vld [vmem:[#allocation5 + $0x6b8] sm:$0xff]
    %v256 = vld [vmem:[#allocation5 + $0x6c0] sm:$0xff]
    %v257 = vld [vmem:[#allocation5 + $0x6c8] sm:$0xff]
    %v258 = vld [vmem:[#allocation5 + $0x6d0] sm:$0xff]
    %v259 = vld [vmem:[#allocation5 + $0x6d8] sm:$0xff]
    %v260 = vld [vmem:[#allocation5 + $0x6e0] sm:$0xff]
    %v261 = vld [vmem:[#allocation5 + $0x6e8] sm:$0xff]
    %v262 = vld [vmem:[#allocation5 + $0x6f0] sm:$0xff]
    %v263 = vld [vmem:[#allocation5 + $0x6f8] sm:$0xff]
    %v264 = vld [vmem:[#allocation5 + $0x700] sm:$0xff]
    %v265 = vld [vmem:[#allocation5 + $0x708] sm:$0xff]
    %v266 = vld [vmem:[#allocation5 + $0x710] sm:$0xff]
    %v267 = vld [vmem:[#allocation5 + $0x718] sm:$0xff]
    %v268 = vld [vmem:[#allocation5 + $0x720] sm:$0xff]
    %v269 = vld [vmem:[#allocation5 + $0x728] sm:$0xff]
    %v270 = vld [vmem:[#allocation5 + $0x730] sm:$0xff]
    %v271 = vld [vmem:[#allocation5 + $0x738] sm:$0xff]
    %v272 = vld [vmem:[#allocation5 + $0x740] sm:$0xff]
    %v273 = vld [vmem:[#allocation5 + $0x748] sm:$0xff]
    %v274 = vld [vmem:[#allocation5 + $0x750] sm:$0xff]
    %v275 = vld [vmem:[#allocation5 + $0x758] sm:$0xff]
    %v276 = vld [vmem:[#allocation5 + $0x760] sm:$0xff]
    %v277 = vld [vmem:[#allocation5 + $0x768] sm:$0xff]
    %v278 = vld [vmem:[#allocation5 + $0x770] sm:$0xff]
    %v279 = vld [vmem:[#allocation5 + $0x778] sm:$0xff]
    %v280 = vld [vmem:[#allocation5 + $0x780] sm:$0xff]
    %v281 = vld [vmem:[#allocation5 + $0x788] sm:$0xff]
    %v282 = vld [vmem:[#allocation5 + $0x790] sm:$0xff]
    %v283 = vld [vmem:[#allocation5 + $0x798] sm:$0xff]
    %v284 = vld [vmem:[#allocation5 + $0x7a0] sm:$0xff]
    %v285 = vld [vmem:[#allocation5 + $0x7a8] sm:$0xff]
    %v286 = vld [vmem:[#allocation5 + $0x7b0] sm:$0xff]
    %v287 = vld [vmem:[#allocation5 + $0x7b8] sm:$0xff]
    %v288 = vld [vmem:[#allocation5 + $0x7c0] sm:$0xff]
    %v289 = vld [vmem:[#allocation5 + $0x7c8] sm:$0xff]
    %v290 = vld [vmem:[#allocation5 + $0x7d0] sm:$0xff]
    %v291 = vld [vmem:[#allocation5 + $0x7d8] sm:$0xff]
    %v292 = vld [vmem:[#allocation5 + $0x7e0] sm:$0xff]
    %v293 = vld [vmem:[#allocation5 + $0x7e8] sm:$0xff]
    %v294 = vld [vmem:[#allocation5 + $0x7f0] sm:$0xff]
    %v295 = vld [vmem:[#allocation5 + $0x7f8] sm:$0xff]
    %296 = vmatprep.subr.mxu0 %v41
    %297 = vmatpush1.msra.mxu0 %v40
    %298 = vmatprep.subr.mxu0 %v49
    %299 = vmatpush1.msra.mxu0 %v48
    %300 = vmatprep.subr.mxu0 %v57
    %301 = vmatpush1.msra.mxu0 %v56
    %302 = vmatprep.subr.mxu0 %v65
    %303 = vmatpush1.msra.mxu0 %v64
    %304 = vmatprep.subr.mxu0 %v73
    %305 = vmatpush1.msra.mxu0 %v72
    %306 = vmatprep.subr.mxu0 %v81
    %307 = vmatpush1.msra.mxu0 %v80
    %308 = vmatprep.subr.mxu0 %v89
    %309 = vmatpush1.msra.mxu0 %v88
    %310 = vmatprep.subr.mxu0 %v97
    %311 = vmatpush1.msra.mxu0 %v96
    %312 = vmatprep.subr.mxu0 %v105
    %313 = vmatpush1.msra.mxu0 %v104
    %314 = vmatprep.subr.mxu0 %v113
    %315 = vmatpush1.msra.mxu0 %v112
    %316 = vmatprep.subr.mxu0 %v121
    %317 = vmatpush1.msra.mxu0 %v120
    %318 = vmatprep.subr.mxu0 %v129
    %319 = vmatpush1.msra.mxu0 %v128
    %320 = vmatprep.subr.mxu0 %v137
    %321 = vmatpush1.msra.mxu0 %v136
    %322 = vmatprep.subr.mxu0 %v145
    %323 = vmatpush1.msra.mxu0 %v144
    %324 = vmatprep.subr.mxu0 %v153
    %325 = vmatpush1.msra.mxu0 %v152
    %326 = vmatprep.subr.mxu0 %v161
    %327 = vmatpush1.msra.mxu0 %v160
    %328 = vmatprep.subr.mxu0 %v169
    %329 = vmatpush1.msra.mxu0 %v168
    %330 = vmatprep.subr.mxu0 %v177
    %331 = vmatpush1.msra.mxu0 %v176
    %332 = vmatprep.subr.mxu0 %v185
    %333 = vmatpush1.msra.mxu0 %v184
    %334 = vmatprep.subr.mxu0 %v193
    %335 = vmatpush1.msra.mxu0 %v192
    %336 = vmatprep.subr.mxu0 %v201
    %337 = vmatpush1.msra.mxu0 %v200
    %338 = vmatprep.subr.mxu0 %v209
    %339 = vmatpush1.msra.mxu0 %v208
    %340 = vmatprep.subr.mxu0 %v217
    %341 = vmatpush1.msra.mxu0 %v216
    %342 = vmatprep.subr.mxu0 %v225
    %343 = vmatpush1.msra.mxu0 %v224
    %344 = vmatprep.subr.mxu0 %v233
    %345 = vmatpush1.msra.mxu0 %v232
    %346 = vmatprep.subr.mxu0 %v241
    %347 = vmatpush1.msra.mxu0 %v240
    %348 = vmatprep.subr.mxu0 %v249
    %349 = vmatpush1.msra.mxu0 %v248
    %350 = vmatprep.subr.mxu0 %v257
    %351 = vmatpush1.msra.mxu0 %v256
    %352 = vmatprep.subr.mxu0 %v265
    %353 = vmatpush1.msra.mxu0 %v264
    %354 = vmatprep.subr.mxu0 %v273
    %355 = vmatpush1.msra.mxu0 %v272
    %356 = vmatprep.subr.mxu0 %v281
    %357 = vmatpush1.msra.mxu0 %v280
    %358 = vmatprep.subr.mxu0 %v289
    %359 = vmatpush1.msra.mxu0 %v288
    %360 = vmatprep.mubr.f32.mxu0 %v39
    %361 = vmatmul.mubr.f32.gmra.mrb[0].mxu0 %v38
    %v362 = vpop.f32.mrb[0].mxu0
    %v363 = vadd.f32 0.0, %v362
    %v364 = vpop.f32.mrb[0].mxu0
    %v365 = vadd.f32 0.0, %v364
    %366 = vdwg.mxu0
    %367 = vmatprep.subr.mxu0 %v43
    %368 = vmatpush1.msra.mxu0 %v42
    %369 = vmatprep.subr.mxu0 %v51
    %370 = vmatpush1.msra.mxu0 %v50
    %371 = vmatprep.subr.mxu0 %v59
    %372 = vmatpush1.msra.mxu0 %v58
    %373 = vmatprep.subr.mxu0 %v67
    %374 = vmatpush1.msra.mxu0 %v66
    %375 = vmatprep.subr.mxu0 %v75
    %376 = vmatpush1.msra.mxu0 %v74
    %377 = vmatprep.subr.mxu0 %v83
    %378 = vmatpush1.msra.mxu0 %v82
    %379 = vmatprep.subr.mxu0 %v91
    %380 = vmatpush1.msra.mxu0 %v90
    %381 = vmatprep.subr.mxu0 %v99
    %382 = vmatpush1.msra.mxu0 %v98
    %383 = vmatprep.subr.mxu0 %v107
    %384 = vmatpush1.msra.mxu0 %v106
    %385 = vmatprep.subr.mxu0 %v115
    %386 = vmatpush1.msra.mxu0 %v114
    %387 = vmatprep.subr.mxu0 %v123
    %388 = vmatpush1.msra.mxu0 %v122
    %389 = vmatprep.subr.mxu0 %v131
    %390 = vmatpush1.msra.mxu0 %v130
    %391 = vmatprep.subr.mxu0 %v139
    %392 = vmatpush1.msra.mxu0 %v138
    %393 = vmatprep.subr.mxu0 %v147
    %394 = vmatpush1.msra.mxu0 %v146
    %395 = vmatprep.subr.mxu0 %v155
    %396 = vmatpush1.msra.mxu0 %v154
    %397 = vmatprep.subr.mxu0 %v163
    %398 = vmatpush1.msra.mxu0 %v162
    %399 = vmatprep.subr.mxu0 %v171
    %400 = vmatpush1.msra.mxu0 %v170
    %401 = vmatprep.subr.mxu0 %v179
    %402 = vmatpush1.msra.mxu0 %v178
    %403 = vmatprep.subr.mxu0 %v187
    %404 = vmatpush1.msra.mxu0 %v186
    %405 = vmatprep.subr.mxu0 %v195
    %406 = vmatpush1.msra.mxu0 %v194
    %407 = vmatprep.subr.mxu0 %v203
    %408 = vmatpush1.msra.mxu0 %v202
    %409 = vmatprep.subr.mxu0 %v211
    %410 = vmatpush1.msra.mxu0 %v210
    %411 = vmatprep.subr.mxu0 %v219
    %412 = vmatpush1.msra.mxu0 %v218
    %413 = vmatprep.subr.mxu0 %v227
    %414 = vmatpush1.msra.mxu0 %v226
    %415 = vmatprep.subr.mxu0 %v235
    %416 = vmatpush1.msra.mxu0 %v234
    %417 = vmatprep.subr.mxu0 %v243
    %418 = vmatpush1.msra.mxu0 %v242
    %419 = vmatprep.subr.mxu0 %v251
    %420 = vmatpush1.msra.mxu0 %v250
    %421 = vmatprep.subr.mxu0 %v259
    %422 = vmatpush1.msra.mxu0 %v258
    %423 = vmatprep.subr.mxu0 %v267
    %424 = vmatpush1.msra.mxu0 %v266
    %425 = vmatprep.subr.mxu0 %v275
    %426 = vmatpush1.msra.mxu0 %v274
    %427 = vmatprep.subr.mxu0 %v283
    %428 = vmatpush1.msra.mxu0 %v282
    %429 = vmatprep.subr.mxu0 %v291
    %430 = vmatpush1.msra.mxu0 %v290
    %431 = vmatprep.mubr.f32.mxu0 %v39
    %432 = vmatmul.mubr.f32.gmra.mrb[0].mxu0 %v38
    %v433 = vpop.f32.mrb[0].mxu0
    %v434 = vadd.f32 0.0, %v433
    %v435 = vpop.f32.mrb[0].mxu0
    %v436 = vadd.f32 0.0, %v435
    %437 = vdwg.mxu0
    %438 = vmatprep.subr.mxu0 %v45
    %439 = vmatpush1.msra.mxu0 %v44
    %440 = vmatprep.subr.mxu0 %v53
    %441 = vmatpush1.msra.mxu0 %v52
    %442 = vmatprep.subr.mxu0 %v61
    %443 = vmatpush1.msra.mxu0 %v60
    %444 = vmatprep.subr.mxu0 %v69
    %445 = vmatpush1.msra.mxu0 %v68
    %446 = vmatprep.subr.mxu0 %v77
    %447 = vmatpush1.msra.mxu0 %v76
    %448 = vmatprep.subr.mxu0 %v85
    %449 = vmatpush1.msra.mxu0 %v84
    %450 = vmatprep.subr.mxu0 %v93
    %451 = vmatpush1.msra.mxu0 %v92
    %452 = vmatprep.subr.mxu0 %v101
    %453 = vmatpush1.msra.mxu0 %v100
    %454 = vmatprep.subr.mxu0 %v109
    %455 = vmatpush1.msra.mxu0 %v108
    %456 = vmatprep.subr.mxu0 %v117
    %457 = vmatpush1.msra.mxu0 %v116
    %458 = vmatprep.subr.mxu0 %v125
    %459 = vmatpush1.msra.mxu0 %v124
    %460 = vmatprep.subr.mxu0 %v133
    %461 = vmatpush1.msra.mxu0 %v132
    %462 = vmatprep.subr.mxu0 %v141
    %463 = vmatpush1.msra.mxu0 %v140
    %464 = vmatprep.subr.mxu0 %v149
    %465 = vmatpush1.msra.mxu0 %v148
    %466 = vmatprep.subr.mxu0 %v157
    %467 = vmatpush1.msra.mxu0 %v156
    %468 = vmatprep.subr.mxu0 %v165
    %469 = vmatpush1.msra.mxu0 %v164
    %470 = vmatprep.subr.mxu0 %v173
    %471 = vmatpush1.msra.mxu0 %v172
    %472 = vmatprep.subr.mxu0 %v181
    %473 = vmatpush1.msra.mxu0 %v180
    %474 = vmatprep.subr.mxu0 %v189
    %475 = vmatpush1.msra.mxu0 %v188
    %476 = vmatprep.subr.mxu0 %v197
    %477 = vmatpush1.msra.mxu0 %v196
    %478 = vmatprep.subr.mxu0 %v205
    %479 = vmatpush1.msra.mxu0 %v204
    %480 = vmatprep.subr.mxu0 %v213
    %481 = vmatpush1.msra.mxu0 %v212
    %482 = vmatprep.subr.mxu0 %v221
    %483 = vmatpush1.msra.mxu0 %v220
    %484 = vmatprep.subr.mxu0 %v229
    %485 = vmatpush1.msra.mxu0 %v228
    %486 = vmatprep.subr.mxu0 %v237
    %487 = vmatpush1.msra.mxu0 %v236
    %488 = vmatprep.subr.mxu0 %v245
    %489 = vmatpush1.msra.mxu0 %v244
    %490 = vmatprep.subr.mxu0 %v253
    %491 = vmatpush1.msra.mxu0 %v252
    %492 = vmatprep.subr.mxu0 %v261
    %493 = vmatpush1.msra.mxu0 %v260
    %494 = vmatprep.subr.mxu0 %v269
    %495 = vmatpush1.msra.mxu0 %v268
    %496 = vmatprep.subr.mxu0 %v277
    %497 = vmatpush1.msra.mxu0 %v276
    %498 = vmatprep.subr.mxu0 %v285
    %499 = vmatpush1.msra.mxu0 %v284
    %500 = vmatprep.subr.mxu0 %v293
    %501 = vmatpush1.msra.mxu0 %v292
    %502 = vmatprep.mubr.f32.mxu0 %v39
    %503 = vmatmul.mubr.f32.gmra.mrb[0].mxu0 %v38
    %v504 = vpop.f32.mrb[0].mxu0
    %v505 = vadd.f32 0.0, %v504
    %v506 = vpop.f32.mrb[0].mxu0
    %v507 = vadd.f32 0.0, %v506
    %508 = vdwg.mxu0
    %509 = vmatprep.subr.mxu0 %v47
    %510 = vmatpush1.msra.mxu0 %v46
    %511 = vmatprep.subr.mxu0 %v55
    %512 = vmatpush1.msra.mxu0 %v54
    %513 = vmatprep.subr.mxu0 %v63
    %514 = vmatpush1.msra.mxu0 %v62
    %515 = vmatprep.subr.mxu0 %v71
    %516 = vmatpush1.msra.mxu0 %v70
    %517 = vmatprep.subr.mxu0 %v79
    %518 = vmatpush1.msra.mxu0 %v78
    %519 = vmatprep.subr.mxu0 %v87
    %520 = vmatpush1.msra.mxu0 %v86
    %521 = vmatprep.subr.mxu0 %v95
    %522 = vmatpush1.msra.mxu0 %v94
    %523 = vmatprep.subr.mxu0 %v103
    %524 = vmatpush1.msra.mxu0 %v102
    %525 = vmatprep.subr.mxu0 %v111
    %526 = vmatpush1.msra.mxu0 %v110
    %527 = vmatprep.subr.mxu0 %v119
    %528 = vmatpush1.msra.mxu0 %v118
    %529 = vmatprep.subr.mxu0 %v127
    %530 = vmatpush1.msra.mxu0 %v126
    %531 = vmatprep.subr.mxu0 %v135
    %532 = vmatpush1.msra.mxu0 %v134
    %533 = vmatprep.subr.mxu0 %v143
    %534 = vmatpush1.msra.mxu0 %v142
    %535 = vmatprep.subr.mxu0 %v151
    %536 = vmatpush1.msra.mxu0 %v150
    %537 = vmatprep.subr.mxu0 %v159
    %538 = vmatpush1.msra.mxu0 %v158
    %539 = vmatprep.subr.mxu0 %v167
    %540 = vmatpush1.msra.mxu0 %v166
    %541 = vmatprep.subr.mxu0 %v175
    %542 = vmatpush1.msra.mxu0 %v174
    %543 = vmatprep.subr.mxu0 %v183
    %544 = vmatpush1.msra.mxu0 %v182
    %545 = vmatprep.subr.mxu0 %v191
    %546 = vmatpush1.msra.mxu0 %v190
    %547 = vmatprep.subr.mxu0 %v199
    %548 = vmatpush1.msra.mxu0 %v198
    %549 = vmatprep.subr.mxu0 %v207
    %550 = vmatpush1.msra.mxu0 %v206
    %551 = vmatprep.subr.mxu0 %v215
    %552 = vmatpush1.msra.mxu0 %v214
    %553 = vmatprep.subr.mxu0 %v223
    %554 = vmatpush1.msra.mxu0 %v222
    %555 = vmatprep.subr.mxu0 %v231
    %556 = vmatpush1.msra.mxu0 %v230
    %557 = vmatprep.subr.mxu0 %v239
    %558 = vmatpush1.msra.mxu0 %v238
    %559 = vmatprep.subr.mxu0 %v247
    %560 = vmatpush1.msra.mxu0 %v246
    %561 = vmatprep.subr.mxu0 %v255
    %562 = vmatpush1.msra.mxu0 %v254
    %563 = vmatprep.subr.mxu0 %v263
    %564 = vmatpush1.msra.mxu0 %v262
    %565 = vmatprep.subr.mxu0 %v271
    %566 = vmatpush1.msra.mxu0 %v270
    %567 = vmatprep.subr.mxu0 %v279
    %568 = vmatpush1.msra.mxu0 %v278
    %569 = vmatprep.subr.mxu0 %v287
    %570 = vmatpush1.msra.mxu0 %v286
    %571 = vmatprep.subr.mxu0 %v295
    %572 = vmatpush1.msra.mxu0 %v294
    %573 = vmatprep.mubr.f32.mxu0 %v39
    %574 = vmatmul.mubr.f32.gmra.mrb[0].mxu0 %v38
    %v575 = vpop.f32.mrb[0].mxu0
    %v576 = vadd.f32 0.0, %v575
    %v577 = vpop.f32.mrb[0].mxu0
    %v578 = vadd.f32 0.0, %v577
    %579 = vdwg.mxu0
    %580 = vst [vmem:[#allocation7] sm:$0xff] %v363
    %581 = vst [vmem:[#allocation7 + $0x8] sm:$0xff] %v365
    %582 = vst [vmem:[#allocation7 + $0x10] sm:$0xff] %v434
    %583 = vst [vmem:[#allocation7 + $0x18] sm:$0xff] %v436
    %584 = vst [vmem:[#allocation7 + $0x20] sm:$0xff] %v505
    %585 = vst [vmem:[#allocation7 + $0x28] sm:$0xff] %v507
    %586 = vst [vmem:[#allocation7 + $0x30] sm:$0xff] %v576
    %587 = vst [vmem:[#allocation7 + $0x38] sm:$0xff] %v578
    // Predicated region
    $region18: #{tpu_custom_call.1} parent=1 // pred_check
      _
    $region19: #{tpu_custom_call.1} parent=1 // pred_check_branch
      %589 = sbr.rel (0) target = $region21
    $region20: #{tpu_custom_call.1} parent=1 // pred_region
      %s591 = ssub.s32 1024, 1024
      %592 = vsyncadd [#allocation4], %s591
      %s594 = sshll.u32 [#allocation7], 4
      %s595 = int_to_ptr.vmem [resolvable:$true] %s594
      %597 = dma.vmem_to_hbm [thread:$0]  %s595, 1024, %s2, [#allocation4]
    $region21: #{tpu_custom_call.1} parent=1 // pred_fallthru
      _
    // Predicated region
    $region22: #{tpu_custom_call.1} parent=1 // pred_check
      _
    $region23: #{tpu_custom_call.1} parent=1 // pred_check_branch
      %599 = sbr.rel (0) target = $region25
    $region24: #{tpu_custom_call.1} parent=1 // pred_region
      %600 = dma.done [#allocation4], 1024
    $region25: #{tpu_custom_call.1} parent=1 // pred_fallthru
      _
    %601 = vsyncpa [#allocation3], 1
    %602 = vsyncpa [#allocation6], 1
    %603 = vsyncpa [#allocation4], 1

</llo_original>
